<compile_context>
chip_gen: v6e
topology: v6e:2x2x1
jax: 0.10.0
libtpu: 0.0.40
codegen_flags: <defaults>
</compile_context>

<pallas_src>
import math

import jax
import jax.numpy as jnp
from jax.experimental import pallas as pl
from jax.experimental.pallas import tpu as pltpu

# ----------------------------- hyper-parameters ------------------------------
BATCH_SIZE = 2
NUM_NODES = 8
NUM_FEATURES = 4
NUM_CLASSES = 3
# branch_num / branch_feature_num default to None in the reference module, so
# input_dim = num_nodes * num_features.  (With branch features the only change
# is a larger flattened input_dim -- same kernel.)
INPUT_DIM = NUM_NODES * NUM_FEATURES          # 32

H2, H3, H4 = 256, 128, 64                     # fc2 / fc3 / fc4 widths


# --------------------------------- kernel ------------------------------------
def mlp_kernel(x_ref,
               w2_ref, b2_ref,
               w3_ref, b3_ref,
               w4_ref, b4_ref,
               w5_ref, b5_ref,
               o_ref):
    """Fused 4-layer MLP forward: all matmuls + ReLUs in one VMEM-resident pass."""
    x = x_ref[...]                                                   # (B, input_dim)

    h = jnp.dot(x, w2_ref[...], preferred_element_type=jnp.float32) + b2_ref[...]
    h = jnp.maximum(h, 0.0)                                          # (B, 256)

    h = jnp.dot(h, w3_ref[...], preferred_element_type=jnp.float32) + b3_ref[...]
    h = jnp.maximum(h, 0.0)                                          # (B, 128)

    h = jnp.dot(h, w4_ref[...], preferred_element_type=jnp.float32) + b4_ref[...]
    h = jnp.maximum(h, 0.0)                                          # (B, 64)

    o_ref[...] = (jnp.dot(h, w5_ref[...], preferred_element_type=jnp.float32)
                  + b5_ref[...])                                     # (B, num_classes)


# -------------------------------- wrapper -------------------------------------
def _vmem_spec():
    return pl.BlockSpec(memory_space=pltpu.MemorySpace.VMEM)


@jax.jit
def forward(params, x):
    """x: (B, num_nodes, num_features) -> logits (B, num_classes).

    Mirrors TI_SimpleNNEdges.forward: flatten per sample, then fc2/3/4 + ReLU,
    then fc5 (no final activation).
    """
    b = x.shape[0]
    x_flat = x.reshape(b, -1).astype(jnp.float32)                    # x.view(B, -1)

    args = (
        x_flat,
        params["w2"], params["b2"],
        params["w3"], params["b3"],
        params["w4"], params["b4"],
        params["w5"], params["b5"],
    )
    return pl.pallas_call(
        mlp_kernel,
        out_shape=jax.ShapeDtypeStruct((b, NUM_CLASSES), jnp.float32),
        in_specs=[_vmem_spec() for _ in args],
        out_specs=_vmem_spec(),
    )(*args)


# ------------------------------ parameters ------------------------------------
def init_params(key):
    """PyTorch nn.Linear-style init: U(-1/sqrt(fan_in), 1/sqrt(fan_in)).

    Weights are stored as (in, out) so the kernel computes x @ W (equivalent to
    PyTorch's x @ W.T with its (out, in) storage).  Biases are stored as
    (1, out) so the in-kernel broadcast add is a plain 2-D op.
    """
    ks = jax.random.split(key, 8)

    def linear(kw, kb, fan_in, fan_out):
        bound = 1.0 / math.sqrt(fan_in)
        w = jax.random.uniform(kw, (fan_in, fan_out), jnp.float32, -bound, bound)
        b = jax.random.uniform(kb, (1, fan_out), jnp.float32, -bound, bound)
        return w, b

    w2, b2 = linear(ks[0], ks[1], INPUT_DIM, H2)
    w3, b3 = linear(ks[2], ks[3], H2, H3)
    w4, b4 = linear(ks[4], ks[5], H3, H4)
    w5, b5 = linear(ks[6], ks[7], H4, NUM_CLASSES)
    return {"w2": w2, "b2": b2, "w3": w3, "b3": b3,
            "w4": w4, "b4": b4, "w5": w5, "b5": b5}


# ------------------------------ reference check --------------------------------
def forward_ref(params, x):
    """Pure-JAX reference of the same forward (for a cheap correctness check)."""
    h = x.reshape(x.shape[0], -1).astype(jnp.float32)
    h = jnp.maximum(h @ params["w2"] + params["b2"], 0.0)
    h = jnp.maximum(h @ params["w3"] + params["b3"], 0.0)
    h = jnp.maximum(h @ params["w4"] + params["b4"], 0.0)
    return h @ params["w5"] + params["b5"]


if __name__ == "__main__":
    key = jax.random.PRNGKey(0)
    kx, kp = jax.random.split(key)

    x = jax.random.normal(kx, (BATCH_SIZE, NUM_NODES, NUM_FEATURES), dtype=jnp.float32)
    params = init_params(kp)

    out = forward(params, x)
    out = jax.block_until_ready(out)

    assert out.shape == (BATCH_SIZE, NUM_CLASSES), out.shape
    assert bool(jnp.all(jnp.isfinite(out)))

    ref = forward_ref(params, x)
    assert bool(jnp.max(jnp.abs(out - ref)) < 1e-4), "mismatch vs JAX reference"

    print("KERNEL_OK")
</pallas_src>

<mosaic_0001>
module attributes {stable_mosaic.version = 11 : i64} {
  func.func @mlp_kernel(%arg0: memref<2x32xf32, #tpu.memory_space<vmem>>, %arg1: memref<32x256xf32, #tpu.memory_space<vmem>>, %arg2: memref<1x256xf32, #tpu.memory_space<vmem>>, %arg3: memref<256x128xf32, #tpu.memory_space<vmem>>, %arg4: memref<1x128xf32, #tpu.memory_space<vmem>>, %arg5: memref<128x64xf32, #tpu.memory_space<vmem>>, %arg6: memref<1x64xf32, #tpu.memory_space<vmem>>, %arg7: memref<64x3xf32, #tpu.memory_space<vmem>>, %arg8: memref<1x3xf32, #tpu.memory_space<vmem>>, %arg9: memref<2x3xf32, #tpu.memory_space<vmem>>) attributes {dimension_semantics = [], scalar_prefetch = 0 : i64, scratch_operands = 0 : i64, tpu.core_type = #tpu.core_type<tc>} {
    %c0 = arith.constant 0 : index
    %c0_0 = arith.constant 0 : index
    %0 = vector.load %arg0[%c0, %c0_0] : memref<2x32xf32, #tpu.memory_space<vmem>>, vector<2x32xf32>
    %c0_1 = arith.constant 0 : index
    %c0_2 = arith.constant 0 : index
    %1 = vector.load %arg1[%c0_1, %c0_2] : memref<32x256xf32, #tpu.memory_space<vmem>>, vector<32x256xf32>
    %cst = arith.constant dense<0.000000e+00> : vector<2x256xf32>
    %2 = tpu.matmul %0, %1, %cst {dimension_numbers = #tpu.dot_dimension_numbers<[1], [0], [0], [1], [0, 0, 1, 1], [], []>} : vector<2x32xf32>, vector<32x256xf32>, vector<2x256xf32> -> vector<2x256xf32>
    %c0_3 = arith.constant 0 : index
    %c0_4 = arith.constant 0 : index
    %3 = vector.load %arg2[%c0_3, %c0_4] : memref<1x256xf32, #tpu.memory_space<vmem>>, vector<1x256xf32>
    %4 = vector.broadcast %3 : vector<1x256xf32> to vector<2x256xf32>
    %5 = arith.addf %2, %4 : vector<2x256xf32>
    %cst_5 = arith.constant 0.000000e+00 : f32
    %6 = vector.broadcast %cst_5 : f32 to vector<2x256xf32>
    %7 = arith.maximumf %5, %6 : vector<2x256xf32>
    %c0_6 = arith.constant 0 : index
    %c0_7 = arith.constant 0 : index
    %8 = vector.load %arg3[%c0_6, %c0_7] : memref<256x128xf32, #tpu.memory_space<vmem>>, vector<256x128xf32>
    %cst_8 = arith.constant dense<0.000000e+00> : vector<2x128xf32>
    %9 = tpu.matmul %7, %8, %cst_8 {dimension_numbers = #tpu.dot_dimension_numbers<[1], [0], [0], [1], [0, 0, 1, 1], [], []>} : vector<2x256xf32>, vector<256x128xf32>, vector<2x128xf32> -> vector<2x128xf32>
    %c0_9 = arith.constant 0 : index
    %c0_10 = arith.constant 0 : index
    %10 = vector.load %arg4[%c0_9, %c0_10] : memref<1x128xf32, #tpu.memory_space<vmem>>, vector<1x128xf32>
    %11 = vector.broadcast %10 : vector<1x128xf32> to vector<2x128xf32>
    %12 = arith.addf %9, %11 : vector<2x128xf32>
    %cst_11 = arith.constant 0.000000e+00 : f32
    %13 = vector.broadcast %cst_11 : f32 to vector<2x128xf32>
    %14 = arith.maximumf %12, %13 : vector<2x128xf32>
    %c0_12 = arith.constant 0 : index
    %c0_13 = arith.constant 0 : index
    %15 = vector.load %arg5[%c0_12, %c0_13] : memref<128x64xf32, #tpu.memory_space<vmem>>, vector<128x64xf32>
    %cst_14 = arith.constant dense<0.000000e+00> : vector<2x64xf32>
    %16 = tpu.matmul %14, %15, %cst_14 {dimension_numbers = #tpu.dot_dimension_numbers<[1], [0], [0], [1], [0, 0, 1, 1], [], []>} : vector<2x128xf32>, vector<128x64xf32>, vector<2x64xf32> -> vector<2x64xf32>
    %c0_15 = arith.constant 0 : index
    %c0_16 = arith.constant 0 : index
    %17 = vector.load %arg6[%c0_15, %c0_16] : memref<1x64xf32, #tpu.memory_space<vmem>>, vector<1x64xf32>
    %18 = vector.broadcast %17 : vector<1x64xf32> to vector<2x64xf32>
    %19 = arith.addf %16, %18 : vector<2x64xf32>
    %cst_17 = arith.constant 0.000000e+00 : f32
    %20 = vector.broadcast %cst_17 : f32 to vector<2x64xf32>
    %21 = arith.maximumf %19, %20 : vector<2x64xf32>
    %c0_18 = arith.constant 0 : index
    %c0_19 = arith.constant 0 : index
    %22 = vector.load %arg7[%c0_18, %c0_19] : memref<64x3xf32, #tpu.memory_space<vmem>>, vector<64x3xf32>
    %cst_20 = arith.constant dense<0.000000e+00> : vector<2x3xf32>
    %23 = tpu.matmul %21, %22, %cst_20 {dimension_numbers = #tpu.dot_dimension_numbers<[1], [0], [0], [1], [0, 0, 1, 1], [], []>} : vector<2x64xf32>, vector<64x3xf32>, vector<2x3xf32> -> vector<2x3xf32>
    %c0_21 = arith.constant 0 : index
    %c0_22 = arith.constant 0 : index
    %24 = vector.load %arg8[%c0_21, %c0_22] : memref<1x3xf32, #tpu.memory_space<vmem>>, vector<1x3xf32>
    %25 = vector.broadcast %24 : vector<1x3xf32> to vector<2x3xf32>
    %26 = arith.addf %23, %25 : vector<2x3xf32>
    %c0_23 = arith.constant 0 : index
    %c0_24 = arith.constant 0 : index
    %27 = vector.load %arg9[%c0_23, %c0_24] : memref<2x3xf32, #tpu.memory_space<vmem>>, vector<2x3xf32>
    tpu.vector_store %arg9[%c0_23, %c0_24], %26 {strides = array<i32>} : memref<2x3xf32, #tpu.memory_space<vmem>>, vector<2x3xf32>,
    return
  }
}

</mosaic_0001>

<llo_original>
// kernel: forward.1
$region0: #{forward.1}
  #allocation0 [shape = 'u32[]', space=smem, size = 0x4, offset = 0x4, fixed_abs, tag = 'smem constant byte address 0x4 - core index']
  #allocation1 [shape = 'u32[144,128]{1,0:T(1,128)}', space=vmem, size = 0x12000, scoped, tag = 'internal scratch']
  %s0 = inlined_call_operand.vmem [shape: f32[2,32], index: 0, kind: input, shape index: {}]
  %s1 = inlined_call_operand.hbm [shape: f32[32,256], index: 1, kind: input, shape index: {}]
  %s2 = inlined_call_operand.vmem [shape: f32[1,256], index: 2, kind: input, shape index: {}]
  %s3 = inlined_call_operand.vmem [shape: f32[256,128], index: 3, kind: input, shape index: {}]
  %s4 = inlined_call_operand.vmem [shape: f32[1,128], index: 4, kind: input, shape index: {}]
  %s5 = inlined_call_operand.vmem [shape: f32[128,64], index: 5, kind: input, shape index: {}]
  %s6 = inlined_call_operand.vmem [shape: f32[1,64], index: 6, kind: input, shape index: {}]
  %s7 = inlined_call_operand.vmem [shape: f32[64,3], index: 7, kind: input, shape index: {}]
  %s8 = inlined_call_operand.vmem [shape: f32[1,3], index: 8, kind: input, shape index: {}]
  %s9 = inlined_call_operand.hbm [shape: f32[2,3], index: 9, kind: output, shape index: {}]
  %s10 = sld [smem:[#allocation0]]
  $region50: #{forward.1} parent=0
    _
  %s12 = ssub.s32 1, %s10
  %s13 = scalar_select 0, %s12, %s10
  $region1: #{forward.1} parent=0
    #allocation2 [shape = 'u8[32768]{0}', space=vmem, size = 0x8000, scoped, tag = 'input window, operand 1, single buffered']
    #allocation3 [shape = 's32[1]{0}', space=sflag, size = 0x4, scoped, tag = 'scoped memory for forward.1']
    #allocation4 [shape = 's32[1]{0}', space=sflag, size = 0x4, scoped, tag = 'scoped memory for forward.1']
    #allocation5 [shape = 'u8[1024]{0}', space=vmem, size = 0x400, scoped, tag = 'output window, operand 0, single buffered']
    %14 = vsyncpa [#allocation3], 0
    %15 = vsyncpa [#allocation4], 0
    // Predicated region
    $region2: #{forward.1} parent=1 // pred_check
      _
    $region3: #{forward.1} parent=1 // pred_check_branch
      %17 = sbr.rel (0) target = $region5
    $region4: #{forward.1} parent=1 // pred_region
      _
    $region5: #{forward.1} parent=1 // pred_fallthru
      _
    // Predicated region
    $region6: #{forward.1} parent=1 // pred_check
      _
    $region7: #{forward.1} parent=1 // pred_check_branch
      %19 = sbr.rel (0) target = $region9
    $region8: #{forward.1} parent=1 // pred_region
      %s21 = ssub.s32 1024, 1024
      %22 = vsyncadd [#allocation3], %s21
      %s23 = sshll.u32 [#allocation2], 4
      %s24 = int_to_ptr.vmem [resolvable:$true] %s23
      %29 = dma.hbm_to_vmem [thread:$0]  %s1, 1024, %s24, [#allocation3], 256, 256, 16
    $region9: #{forward.1} parent=1 // pred_fallthru
      _
    // Predicated region
    $region10: #{forward.1} parent=1 // pred_check
      _
    $region11: #{forward.1} parent=1 // pred_check_branch
      %31 = sbr.rel (0) target = $region13
    $region12: #{forward.1} parent=1 // pred_region
      _
    $region13: #{forward.1} parent=1 // pred_fallthru
      _
    // Predicated region
    $region14: #{forward.1} parent=1 // pred_check
      _
    $region15: #{forward.1} parent=1 // pred_check_branch
      %33 = sbr.rel (0) target = $region17
    $region16: #{forward.1} parent=1 // pred_region
      _
    $region17: #{forward.1} parent=1 // pred_fallthru
      _
    // Predicated region
    $region18: #{forward.1} parent=1 // pred_check
      _
    $region19: #{forward.1} parent=1 // pred_check_branch
      %35 = sbr.rel (0) target = $region21
    $region20: #{forward.1} parent=1 // pred_region
      _
    $region21: #{forward.1} parent=1 // pred_fallthru
      _
    // Predicated region
    $region22: #{forward.1} parent=1 // pred_check
      _
    $region23: #{forward.1} parent=1 // pred_check_branch
      %37 = sbr.rel (0) target = $region25
    $region24: #{forward.1} parent=1 // pred_region
      _
    $region25: #{forward.1} parent=1 // pred_fallthru
      _
    // Predicated region
    $region26: #{forward.1} parent=1 // pred_check
      _
    $region27: #{forward.1} parent=1 // pred_check_branch
      %39 = sbr.rel (0) target = $region29
    $region28: #{forward.1} parent=1 // pred_region
      _
    $region29: #{forward.1} parent=1 // pred_fallthru
      _
    // Predicated region
    $region30: #{forward.1} parent=1 // pred_check
      _
    $region31: #{forward.1} parent=1 // pred_check_branch
      %41 = sbr.rel (0) target = $region33
    $region32: #{forward.1} parent=1 // pred_region
      _
    $region33: #{forward.1} parent=1 // pred_fallthru
      _
    // Predicated region
    $region34: #{forward.1} parent=1 // pred_check
      _
    $region35: #{forward.1} parent=1 // pred_check_branch
      %43 = sbr.rel (0) target = $region37
    $region36: #{forward.1} parent=1 // pred_region
      _
    $region37: #{forward.1} parent=1 // pred_fallthru
      _
    // Predicated region
    $region38: #{forward.1} parent=1 // pred_check
      _
    $region39: #{forward.1} parent=1 // pred_check_branch
      %45 = sbr.rel (0) target = $region41
    $region40: #{forward.1} parent=1 // pred_region
      %46 = dma.done [#allocation3], 1024
    $region41: #{forward.1} parent=1 // pred_fallthru
      _
    %v47 = vld [vmem:[%s0] sm:$0x3]
    %v48 = vld [vmem:[#allocation2] sm:$0xff]
    %v49 = vld [vmem:[#allocation2 + $0x8] sm:$0xff]
    %v50 = vld [vmem:[#allocation2 + $0x10] sm:$0xff]
    %v51 = vld [vmem:[#allocation2 + $0x18] sm:$0xff]
    %v52 = vld [vmem:[#allocation2 + $0x20] sm:$0xff]
    %v53 = vld [vmem:[#allocation2 + $0x28] sm:$0xff]
    %v54 = vld [vmem:[#allocation2 + $0x30] sm:$0xff]
    %v55 = vld [vmem:[#allocation2 + $0x38] sm:$0xff]
    %v56 = vld [vmem:[%s2] sm:$0x3]
    %v58 = vlaneseq
    %v59 = vshrl.u32 %v58, 7
    %v60 = vsub.s32 0, %v59
    %v61 = vrot.slane %v56, %v60
    %v62 = vlaneseq
    %v63 = vshrl.u32 %v62, 7
    %v64 = vsub.s32 1, %v63
    %v65 = vrot.slane %v56, %v64
    %vm68 = vcmask 261120
    %v70 = vsel %vm68, %v47, 0
    %72 = vmatprep.subr.mxu0 0.0
    %73 = vmatpush1.msra.mxu0 0.0
    %74 = vmatprep.subr.mxu0 0.0
    %75 = vmatpush1.msra.mxu0 0.0
    %76 = vmatprep.subr.mxu0 0.0
    %77 = vmatpush1.msra.mxu0 0.0
    %78 = vmatprep.subr.mxu0 0.0
    %79 = vmatpush1.msra.mxu0 0.0
    %80 = vmatprep.subr.mxu0 0.0
    %81 = vmatpush1.msra.mxu0 0.0
    %82 = vmatprep.subr.mxu0 0.0
    %83 = vmatpush1.msra.mxu0 0.0
    %84 = vmatprep.subr.mxu0 0.0
    %85 = vmatpush1.msra.mxu0 0.0
    %86 = vmatprep.subr.mxu0 0.0
    %87 = vmatpush1.msra.mxu0 0.0
    %88 = vmatprep.subr.mxu0 0.0
    %89 = vmatpush1.msra.mxu0 0.0
    %90 = vmatprep.subr.mxu0 0.0
    %91 = vmatpush1.msra.mxu0 0.0
    %92 = vmatprep.subr.mxu0 0.0
    %93 = vmatpush1.msra.mxu0 0.0
    %94 = vmatprep.subr.mxu0 0.0
    %95 = vmatpush1.msra.mxu0 0.0
    %96 = vmatprep.subr.mxu0 %v55
    %97 = vmatpush1.msra.mxu0 %v54
    %98 = vmatprep.subr.mxu0 %v53
    %99 = vmatpush1.msra.mxu0 %v52
    %100 = vmatprep.subr.mxu0 %v51
    %101 = vmatpush1.msra.mxu0 %v50
    %102 = vmatprep.subr.mxu0 %v49
    %103 = vmatpush1.msra.mxu0 %v48
    %104 = vmatprep.subr.mxu0 0.0
    %105 = vmatpush2.msra.mxu0 0.0
    %106 = vmatprep.subr.mxu0 0.0
    %107 = vmatpush2.msra.mxu0 0.0
    %108 = vmatprep.subr.mxu0 0.0
    %109 = vmatpush2.msra.mxu0 0.0
    %110 = vmatprep.subr.mxu0 0.0
    %111 = vmatpush2.msra.mxu0 0.0
    %112 = vmatprep.subr.mxu0 0.0
    %113 = vmatpush2.msra.mxu0 0.0
    %114 = vmatprep.subr.mxu0 0.0
    %115 = vmatpush2.msra.mxu0 0.0
    %116 = vmatprep.subr.mxu0 0.0
    %117 = vmatpush2.msra.mxu0 0.0
    %118 = vmatprep.subr.mxu0 0.0
    %119 = vmatpush2.msra.mxu0 0.0
    %120 = vmatprep.subr.mxu0 0.0
    %121 = vmatpush2.msra.mxu0 0.0
    %122 = vmatprep.subr.mxu0 0.0
    %123 = vmatpush2.msra.mxu0 0.0
    %124 = vmatprep.subr.mxu0 0.0
    %125 = vmatpush2.msra.mxu0 0.0
    %126 = vmatprep.subr.mxu0 0.0
    %127 = vmatpush2.msra.mxu0 0.0
    %128 = vmatprep.subr.mxu0 0.0
    %129 = vmatpush2.msra.mxu0 0.0
    %130 = vmatprep.subr.mxu0 0.0
    %131 = vmatpush2.msra.mxu0 0.0
    %132 = vmatprep.subr.mxu0 0.0
    %133 = vmatpush2.msra.mxu0 0.0
    %134 = vmatprep.subr.mxu0 0.0
    %135 = vmatpush2.msra.mxu0 0.0
    %136 = vmatprep.mubr.f32.mxu0 0.0
    %137 = vmatmul.mubr.f32.gmra.mxu0 %v70
    %v138 = vpop.f32.mrf.mxu0
    %v139 = vadd.f32 %v61, %v138
    %v140 = vpop.f32.mrf.mxu0
    %v141 = vadd.f32 %v65, %v140
    %142 = vdwg.mxu0
    %v143 = vmax.f32 %v139, 0.0
    %v144 = vmax.f32 %v141, 0.0
    %v145 = vld [vmem:[%s3] sm:$0xff]
    %v146 = vld [vmem:[%s3 + $0x8] sm:$0xff]
    %v147 = vld [vmem:[%s3 + $0x10] sm:$0xff]
    %v148 = vld [vmem:[%s3 + $0x18] sm:$0xff]
    %v149 = vld [vmem:[%s3 + $0x20] sm:$0xff]
    %v150 = vld [vmem:[%s3 + $0x28] sm:$0xff]
    %v151 = vld [vmem:[%s3 + $0x30] sm:$0xff]
    %v152 = vld [vmem:[%s3 + $0x38] sm:$0xff]
    %v153 = vld [vmem:[%s3 + $0x40] sm:$0xff]
    %v154 = vld [vmem:[%s3 + $0x48] sm:$0xff]
    %v155 = vld [vmem:[%s3 + $0x50] sm:$0xff]
    %v156 = vld [vmem:[%s3 + $0x58] sm:$0xff]
    %v157 = vld [vmem:[%s3 + $0x60] sm:$0xff]
    %v158 = vld [vmem:[%s3 + $0x68] sm:$0xff]
    %v159 = vld [vmem:[%s3 + $0x70] sm:$0xff]
    %v160 = vld [vmem:[%s3 + $0x78] sm:$0xff]
    %v161 = vld [vmem:[%s3 + $0x80] sm:$0xff]
    %v162 = vld [vmem:[%s3 + $0x88] sm:$0xff]
    %v163 = vld [vmem:[%s3 + $0x90] sm:$0xff]
    %v164 = vld [vmem:[%s3 + $0x98] sm:$0xff]
    %v165 = vld [vmem:[%s3 + $0xa0] sm:$0xff]
    %v166 = vld [vmem:[%s3 + $0xa8] sm:$0xff]
    %v167 = vld [vmem:[%s3 + $0xb0] sm:$0xff]
    %v168 = vld [vmem:[%s3 + $0xb8] sm:$0xff]
    %v169 = vld [vmem:[%s3 + $0xc0] sm:$0xff]
    %v170 = vld [vmem:[%s3 + $0xc8] sm:$0xff]
    %v171 = vld [vmem:[%s3 + $0xd0] sm:$0xff]
    %v172 = vld [vmem:[%s3 + $0xd8] sm:$0xff]
    %v173 = vld [vmem:[%s3 + $0xe0] sm:$0xff]
    %v174 = vld [vmem:[%s3 + $0xe8] sm:$0xff]
    %v175 = vld [vmem:[%s3 + $0xf0] sm:$0xff]
    %v176 = vld [vmem:[%s3 + $0xf8] sm:$0xff]
    %v177 = vld [vmem:[%s4] sm:$0x1]
    %v179 = vlaneseq
    %v180 = vshrl.u32 %v179, 7
    %v181 = vsub.s32 0, %v180
    %v182 = vrot.slane %v177, %v181
    %184 = vmatprep.subr.mxu0 0.0
    %185 = vmatpush1.msra.mxu0 %v160
    %186 = vmatprep.subr.mxu0 0.0
    %187 = vmatpush1.msra.mxu0 %v159
    %188 = vmatprep.subr.mxu0 0.0
    %189 = vmatpush1.msra.mxu0 %v158
    %190 = vmatprep.subr.mxu0 0.0
    %191 = vmatpush1.msra.mxu0 %v157
    %192 = vmatprep.subr.mxu0 0.0
    %193 = vmatpush1.msra.mxu0 %v156
    %194 = vmatprep.subr.mxu0 0.0
    %195 = vmatpush1.msra.mxu0 %v155
    %196 = vmatprep.subr.mxu0 0.0
    %197 = vmatpush1.msra.mxu0 %v154
    %198 = vmatprep.subr.mxu0 0.0
    %199 = vmatpush1.msra.mxu0 %v153
    %200 = vmatprep.subr.mxu0 0.0
    %201 = vmatpush1.msra.mxu0 %v152
    %202 = vmatprep.subr.mxu0 0.0
    %203 = vmatpush1.msra.mxu0 %v151
    %204 = vmatprep.subr.mxu0 0.0
    %205 = vmatpush1.msra.mxu0 %v150
    %206 = vmatprep.subr.mxu0 0.0
    %207 = vmatpush1.msra.mxu0 %v149
    %208 = vmatprep.subr.mxu0 0.0
    %209 = vmatpush1.msra.mxu0 %v148
    %210 = vmatprep.subr.mxu0 0.0
    %211 = vmatpush1.msra.mxu0 %v147
    %212 = vmatprep.subr.mxu0 0.0
    %213 = vmatpush1.msra.mxu0 %v146
    %214 = vmatprep.subr.mxu0 0.0
    %215 = vmatpush1.msra.mxu0 %v145
    %216 = vmatprep.subr.mxu0 0.0
    %217 = vmatpush2.msra.mxu0 %v176
    %218 = vmatprep.subr.mxu0 0.0
    %219 = vmatpush2.msra.mxu0 %v175
    %220 = vmatprep.subr.mxu0 0.0
    %221 = vmatpush2.msra.mxu0 %v174
    %222 = vmatprep.subr.mxu0 0.0
    %223 = vmatpush2.msra.mxu0 %v173
    %224 = vmatprep.subr.mxu0 0.0
    %225 = vmatpush2.msra.mxu0 %v172
    %226 = vmatprep.subr.mxu0 0.0
    %227 = vmatpush2.msra.mxu0 %v171
    %228 = vmatprep.subr.mxu0 0.0
    %229 = vmatpush2.msra.mxu0 %v170
    %230 = vmatprep.subr.mxu0 0.0
    %231 = vmatpush2.msra.mxu0 %v169
    %232 = vmatprep.subr.mxu0 0.0
    %233 = vmatpush2.msra.mxu0 %v168
    %234 = vmatprep.subr.mxu0 0.0
    %235 = vmatpush2.msra.mxu0 %v167
    %236 = vmatprep.subr.mxu0 0.0
    %237 = vmatpush2.msra.mxu0 %v166
    %238 = vmatprep.subr.mxu0 0.0
    %239 = vmatpush2.msra.mxu0 %v165
    %240 = vmatprep.subr.mxu0 0.0
    %241 = vmatpush2.msra.mxu0 %v164
    %242 = vmatprep.subr.mxu0 0.0
    %243 = vmatpush2.msra.mxu0 %v163
    %244 = vmatprep.subr.mxu0 0.0
    %245 = vmatpush2.msra.mxu0 %v162
    %246 = vmatprep.subr.mxu0 0.0
    %247 = vmatpush2.msra.mxu0 %v161
    %248 = vmatprep.mubr.f32.mxu0 %v144
    %249 = vmatmul.mubr.f32.gmra.mxu0 %v143
    %v250 = vpop.f32.mrf.mxu0
    %v251 = vadd.f32 %v182, %v250
    %v252 = vpop.f32.mrf.mxu0
    %253 = vdwg.mxu0
    %v254 = vmax.f32 %v251, 0.0
    %v255 = vld [vmem:[%s5] sm:$0xff]
    %v256 = vld [vmem:[%s5 + $0x8] sm:$0xff]
    %v257 = vld [vmem:[%s5 + $0x10] sm:$0xff]
    %v258 = vld [vmem:[%s5 + $0x18] sm:$0xff]
    %v259 = vld [vmem:[%s5 + $0x20] sm:$0xff]
    %v260 = vld [vmem:[%s5 + $0x28] sm:$0xff]
    %v261 = vld [vmem:[%s5 + $0x30] sm:$0xff]
    %v262 = vld [vmem:[%s5 + $0x38] sm:$0xff]
    %v263 = vld [vmem:[%s5 + $0x40] sm:$0xff]
    %v264 = vld [vmem:[%s5 + $0x48] sm:$0xff]
    %v265 = vld [vmem:[%s5 + $0x50] sm:$0xff]
    %v266 = vld [vmem:[%s5 + $0x58] sm:$0xff]
    %v267 = vld [vmem:[%s5 + $0x60] sm:$0xff]
    %v268 = vld [vmem:[%s5 + $0x68] sm:$0xff]
    %v269 = vld [vmem:[%s5 + $0x70] sm:$0xff]
    %v270 = vld [vmem:[%s5 + $0x78] sm:$0xff]
    %v271 = vld [vmem:[%s6] sm:$0x1]
    %v273 = vlaneseq
    %v274 = vshrl.u32 %v273, 7
    %v275 = vsub.s32 0, %v274
    %v276 = vrot.slane %v271, %v275
    %278 = vmatprep.subr.mxu0 0.0
    %279 = vmatpush1.msra.mxu0 %v270
    %280 = vmatprep.subr.mxu0 0.0
    %281 = vmatpush1.msra.mxu0 %v269
    %282 = vmatprep.subr.mxu0 0.0
    %283 = vmatpush1.msra.mxu0 %v268
    %284 = vmatprep.subr.mxu0 0.0
    %285 = vmatpush1.msra.mxu0 %v267
    %286 = vmatprep.subr.mxu0 0.0
    %287 = vmatpush1.msra.mxu0 %v266
    %288 = vmatprep.subr.mxu0 0.0
    %289 = vmatpush1.msra.mxu0 %v265
    %290 = vmatprep.subr.mxu0 0.0
    %291 = vmatpush1.msra.mxu0 %v264
    %292 = vmatprep.subr.mxu0 0.0
    %293 = vmatpush1.msra.mxu0 %v263
    %294 = vmatprep.subr.mxu0 0.0
    %295 = vmatpush1.msra.mxu0 %v262
    %296 = vmatprep.subr.mxu0 0.0
    %297 = vmatpush1.msra.mxu0 %v261
    %298 = vmatprep.subr.mxu0 0.0
    %299 = vmatpush1.msra.mxu0 %v260
    %300 = vmatprep.subr.mxu0 0.0
    %301 = vmatpush1.msra.mxu0 %v259
    %302 = vmatprep.subr.mxu0 0.0
    %303 = vmatpush1.msra.mxu0 %v258
    %304 = vmatprep.subr.mxu0 0.0
    %305 = vmatpush1.msra.mxu0 %v257
    %306 = vmatprep.subr.mxu0 0.0
    %307 = vmatpush1.msra.mxu0 %v256
    %308 = vmatprep.subr.mxu0 0.0
    %309 = vmatpush1.msra.mxu0 %v255
    %310 = vmatprep.subr.mxu0 0.0
    %311 = vmatpush2.msra.mxu0 0.0
    %312 = vmatprep.subr.mxu0 0.0
    %313 = vmatpush2.msra.mxu0 0.0
    %314 = vmatprep.subr.mxu0 0.0
    %315 = vmatpush2.msra.mxu0 0.0
    %316 = vmatprep.subr.mxu0 0.0
    %317 = vmatpush2.msra.mxu0 0.0
    %318 = vmatprep.subr.mxu0 0.0
    %319 = vmatpush2.msra.mxu0 0.0
    %320 = vmatprep.subr.mxu0 0.0
    %321 = vmatpush2.msra.mxu0 0.0
    %322 = vmatprep.subr.mxu0 0.0
    %323 = vmatpush2.msra.mxu0 0.0
    %324 = vmatprep.subr.mxu0 0.0
    %325 = vmatpush2.msra.mxu0 0.0
    %326 = vmatprep.subr.mxu0 0.0
    %327 = vmatpush2.msra.mxu0 0.0
    %328 = vmatprep.subr.mxu0 0.0
    %329 = vmatpush2.msra.mxu0 0.0
    %330 = vmatprep.subr.mxu0 0.0
    %331 = vmatpush2.msra.mxu0 0.0
    %332 = vmatprep.subr.mxu0 0.0
    %333 = vmatpush2.msra.mxu0 0.0
    %334 = vmatprep.subr.mxu0 0.0
    %335 = vmatpush2.msra.mxu0 0.0
    %336 = vmatprep.subr.mxu0 0.0
    %337 = vmatpush2.msra.mxu0 0.0
    %338 = vmatprep.subr.mxu0 0.0
    %339 = vmatpush2.msra.mxu0 0.0
    %340 = vmatprep.subr.mxu0 0.0
    %341 = vmatpush2.msra.mxu0 0.0
    %342 = vmatprep.mubr.f32.mxu0 0.0
    %343 = vmatmul.mubr.f32.gmra.mxu0 %v254
    %v344 = vpop.f32.mrf.mxu0
    %v345 = vadd.f32 %v276, %v344
    %v346 = vpop.f32.mrf.mxu0
    %347 = vdwg.mxu0
    %v348 = vmax.f32 %v345, 0.0
    %v349 = vld [vmem:[%s7] sm:$0xff]
    %v350 = vld [vmem:[%s7 + $0x8] sm:$0xff]
    %v351 = vld [vmem:[%s7 + $0x10] sm:$0xff]
    %v352 = vld [vmem:[%s7 + $0x18] sm:$0xff]
    %v353 = vld [vmem:[%s7 + $0x20] sm:$0xff]
    %v354 = vld [vmem:[%s7 + $0x28] sm:$0xff]
    %v355 = vld [vmem:[%s7 + $0x30] sm:$0xff]
    %v356 = vld [vmem:[%s7 + $0x38] sm:$0xff]
    %v357 = vld [vmem:[%s8] sm:$0x1]
    %v359 = vlaneseq
    %v360 = vshrl.u32 %v359, 7
    %v361 = vsub.s32 0, %v360
    %v362 = vrot.slane %v357, %v361
    %vm364 = vcmask 523264
    %v366 = vsel %vm364, %v348, 0
    %368 = vmatprep.subr.mxu0 0.0
    %369 = vmatpush1.msra.mxu0 0.0
    %370 = vmatprep.subr.mxu0 0.0
    %371 = vmatpush1.msra.mxu0 0.0
    %372 = vmatprep.subr.mxu0 0.0
    %373 = vmatpush1.msra.mxu0 0.0
    %374 = vmatprep.subr.mxu0 0.0
    %375 = vmatpush1.msra.mxu0 0.0
    %376 = vmatprep.subr.mxu0 0.0
    %377 = vmatpush1.msra.mxu0 0.0
    %378 = vmatprep.subr.mxu0 0.0
    %379 = vmatpush1.msra.mxu0 0.0
    %380 = vmatprep.subr.mxu0 0.0
    %381 = vmatpush1.msra.mxu0 0.0
    %382 = vmatprep.subr.mxu0 0.0
    %383 = vmatpush1.msra.mxu0 0.0
    %384 = vmatprep.subr.mxu0 0.0
    %385 = vmatpush1.msra.mxu0 %v356
    %386 = vmatprep.subr.mxu0 0.0
    %387 = vmatpush1.msra.mxu0 %v355
    %388 = vmatprep.subr.mxu0 0.0
    %389 = vmatpush1.msra.mxu0 %v354
    %390 = vmatprep.subr.mxu0 0.0
    %391 = vmatpush1.msra.mxu0 %v353
    %392 = vmatprep.subr.mxu0 0.0
    %393 = vmatpush1.msra.mxu0 %v352
    %394 = vmatprep.subr.mxu0 0.0
    %395 = vmatpush1.msra.mxu0 %v351
    %396 = vmatprep.subr.mxu0 0.0
    %397 = vmatpush1.msra.mxu0 %v350
    %398 = vmatprep.subr.mxu0 0.0
    %399 = vmatpush1.msra.mxu0 %v349
    %400 = vmatprep.subr.mxu0 0.0
    %401 = vmatpush2.msra.mxu0 0.0
    %402 = vmatprep.subr.mxu0 0.0
    %403 = vmatpush2.msra.mxu0 0.0
    %404 = vmatprep.subr.mxu0 0.0
    %405 = vmatpush2.msra.mxu0 0.0
    %406 = vmatprep.subr.mxu0 0.0
    %407 = vmatpush2.msra.mxu0 0.0
    %408 = vmatprep.subr.mxu0 0.0
    %409 = vmatpush2.msra.mxu0 0.0
    %410 = vmatprep.subr.mxu0 0.0
    %411 = vmatpush2.msra.mxu0 0.0
    %412 = vmatprep.subr.mxu0 0.0
    %413 = vmatpush2.msra.mxu0 0.0
    %414 = vmatprep.subr.mxu0 0.0
    %415 = vmatpush2.msra.mxu0 0.0
    %416 = vmatprep.subr.mxu0 0.0
    %417 = vmatpush2.msra.mxu0 0.0
    %418 = vmatprep.subr.mxu0 0.0
    %419 = vmatpush2.msra.mxu0 0.0
    %420 = vmatprep.subr.mxu0 0.0
    %421 = vmatpush2.msra.mxu0 0.0
    %422 = vmatprep.subr.mxu0 0.0
    %423 = vmatpush2.msra.mxu0 0.0
    %424 = vmatprep.subr.mxu0 0.0
    %425 = vmatpush2.msra.mxu0 0.0
    %426 = vmatprep.subr.mxu0 0.0
    %427 = vmatpush2.msra.mxu0 0.0
    %428 = vmatprep.subr.mxu0 0.0
    %429 = vmatpush2.msra.mxu0 0.0
    %430 = vmatprep.subr.mxu0 0.0
    %431 = vmatpush2.msra.mxu0 0.0
    %432 = vmatprep.mubr.f32.mxu0 0.0
    %433 = vmatmul.mubr.f32.gmra.mxu0 %v366
    %v434 = vpop.f32.mrf.mxu0
    %v435 = vadd.f32 %v362, %v434
    %v436 = vpop.f32.mrf.mxu0
    %437 = vdwg.mxu0
    %vm438 = vcmask 17408
    %439 = vst.msk [vmem:[#allocation5] sm:$0x3] %vm438, %v435
    // Predicated region
    $region42: #{forward.1} parent=1 // pred_check
      _
    $region43: #{forward.1} parent=1 // pred_check_branch
      %441 = sbr.rel (0) target = $region45
    $region44: #{forward.1} parent=1 // pred_region
      %s443 = ssub.s32 32, 32
      %444 = vsyncadd [#allocation4], %s443
      %s446 = sshll.u32 [#allocation5], 4
      %s447 = int_to_ptr.vmem [resolvable:$true] %s446
      %449 = dma.vmem_to_hbm [thread:$0]  %s447, 32, %s9, [#allocation4]
    $region45: #{forward.1} parent=1 // pred_fallthru
      _
    // Predicated region
    $region46: #{forward.1} parent=1 // pred_check
      _
    $region47: #{forward.1} parent=1 // pred_check_branch
      %451 = sbr.rel (0) target = $region49
    $region48: #{forward.1} parent=1 // pred_region
      %452 = dma.done [#allocation4], 32
    $region49: #{forward.1} parent=1 // pred_fallthru
      _
    %453 = vsyncpa [#allocation3], 1
    %454 = vsyncpa [#allocation4], 1

</llo_original>
